<compile_context>
chip_gen: v6e
topology: v6e:2x2x1
jax: 0.10.0
libtpu: 0.0.40
codegen_flags: <defaults>
</compile_context>

<pallas_src>
import functools

import jax
import jax.numpy as jnp
from jax.experimental import pallas as pl
from jax.experimental.pallas import tpu as pltpu


def _cdiv(a, b):
    return -(-a // b)


def _round_up(v, m):
    return _cdiv(v, m) * m


def _loss_tail(dist_sq, y, margin):
    dist = jnp.sqrt(dist_sq + 1e-10)                 # matches spec epsilon
    mdist = jnp.maximum(margin - dist, 0.0)          # clamp(min=0)
    return y * dist_sq + (1.0 - y) * (mdist * mdist)


def _contrastive_single_kernel(x0_ref, x1_ref, y_ref, partial_ref, *,
                               margin, B, TB, mask_batch):
    """D fits in one feature tile: everything in one shot per batch tile."""
    diff = x0_ref[...].astype(jnp.float32) - x1_ref[...].astype(jnp.float32)
    dist_sq = jnp.sum(diff * diff, axis=1, keepdims=True)        # (TB, 1)
    loss = _loss_tail(dist_sq, y_ref[...], margin)               # (TB, 1)
    if mask_batch:                                               # ragged batch tail
        bi = pl.program_id(0)
        row = jax.lax.broadcasted_iota(jnp.int32, (TB, 1), 0)
        loss = jnp.where(row < (B - bi * TB), loss, 0.0)
    partial_ref[0, 0] = jnp.sum(loss)


def _contrastive_multi_kernel(x0_ref, x1_ref, y_ref, partial_ref, acc_ref, *,
                              margin, B, D, TB, TD, mask_batch, mask_feat):
    """D split across feature tiles: lane-partial accumulation per step."""
    bi = pl.program_id(0)
    dj = pl.program_id(1)

    @pl.when(dj == 0)
    def _():
        acc_ref[...] = jnp.zeros_like(acc_ref)

    diff = x0_ref[...].astype(jnp.float32) - x1_ref[...].astype(jnp.float32)
    sq = diff * diff
    if mask_feat:                                    # ragged feature tail
        col = jax.lax.broadcasted_iota(jnp.int32, (1, TD), 1)
        sq = jnp.where(col < (D - dj * TD), sq, 0.0)

    # Lane-partial accumulation: pure VALU adds over 128-lane chunks,
    # no cross-lane (XLU) reduction on the hot feature loop.
    part = sq[:, 0:128]
    for c in range(1, TD // 128):
        part = part + sq[:, c * 128:(c + 1) * 128]
    acc_ref[...] += part                             # (TB, 128) f32

    @pl.when(dj == pl.num_programs(1) - 1)
    def _():
        dist_sq = jnp.sum(acc_ref[...], axis=1, keepdims=True)   # single XLU reduce
        loss = _loss_tail(dist_sq, y_ref[...], margin)
        if mask_batch:
            row = jax.lax.broadcasted_iota(jnp.int32, (TB, 1), 0)
            loss = jnp.where(row < (B - bi * TB), loss, 0.0)
        partial_ref[0, 0] = jnp.sum(loss)


def contrastive_loss(x0, x1, y, margin=1.0, *, max_tile_feature_bytes=64 * 1024):
    """Pallas equivalent of ContrastiveLoss(margin).forward(x0, x1, y)."""
    assert x0.ndim == 2 and x1.ndim == 2 and y.ndim == 1
    assert x0.shape == x1.shape
    assert x1.shape[0] == y.shape[0]
    assert x1.shape[0] > 0

    B, D = x0.shape
    itemsize = jnp.dtype(x0.dtype).itemsize
    sub = max(8, 32 // itemsize)          # sublane multiple: 8 f32 / 16 bf16 / 32 int8

    # ---- generation-aware VMEM budgeting ----------------------------------
    try:
        vmem_cap = int(pltpu.get_tpu_info().vmem_capacity_bytes)
    except Exception:
        vmem_cap = 64 * 1024 * 1024       # conservative fallback (v7x per-TC)
    footprint_budget = min(vmem_cap // 2, 32 * 1024 * 1024)

    # ---- feature tiling ----------------------------------------------------
    # Single full-width tile for typical D; otherwise a lane-aligned tile
    # chosen to minimize the ragged tail (tail is masked in-kernel).
    max_td = max(128, max_tile_feature_bytes // itemsize)
    if D <= max_td:
        TD, nd = D, 1
    else:
        TD = _round_up(_cdiv(D, _cdiv(D, max_td)), 128)
        nd = _cdiv(D, TD)

    # ---- batch tiling ------------------------------------------------------
    # 2 inputs x 2 pipeline buffers of (TB, TD) kept under the footprint
    # budget, so each grid step moves multi-MiB DMAs.
    TB = footprint_budget // (4 * TD * itemsize)
    TB = max(sub, (TB // sub) * sub)
    TB = min(TB, 8192, _round_up(B, sub))
    nb = _cdiv(B, TB)
    # Megacore: give the "parallel" batch axis >= 2 tiles so both v7x
    # TensorCores get work (an extra grid step is noise on 1-TC chips).
    if nb == 1 and B >= 2 * sub:
        TB = _round_up(_cdiv(B, 2), sub)
        nb = _cdiv(B, TB)

    mask_batch = (B % TB) != 0
    y2 = y.astype(jnp.float32).reshape(B, 1)

    tile_bytes = TB * TD * itemsize
    acc_bytes = TB * 128 * 4 if nd > 1 else 0
    footprint = 4 * tile_bytes + 4 * TB * 4 + acc_bytes
    vmem_limit = int(min(vmem_cap * 3 // 4,
                         max(16 * 1024 * 1024, footprint + (4 << 20))))

    if nd == 1:
        kernel = functools.partial(_contrastive_single_kernel,
                                   margin=float(margin), B=B, TB=TB,
                                   mask_batch=mask_batch)
        partials = pl.pallas_call(
            kernel,
            out_shape=jax.ShapeDtypeStruct((nb, 1), jnp.float32),
            grid=(nb,),
            in_specs=[
                pl.BlockSpec((TB, D), lambda bi: (bi, 0)),
                pl.BlockSpec((TB, D), lambda bi: (bi, 0)),
                pl.BlockSpec((TB, 1), lambda bi: (bi, 0)),
            ],
            out_specs=pl.BlockSpec((1, 1), lambda bi: (bi, 0),
                                   memory_space=pltpu.SMEM),
            compiler_params=pltpu.CompilerParams(
                dimension_semantics=("parallel",),
                vmem_limit_bytes=vmem_limit,
            ),
        )(x0, x1, y2)
    else:
        mask_feat = (D % TD) != 0
        kernel = functools.partial(_contrastive_multi_kernel,
                                   margin=float(margin), B=B, D=D, TB=TB, TD=TD,
                                   mask_batch=mask_batch, mask_feat=mask_feat)
        partials = pl.pallas_call(
            kernel,
            out_shape=jax.ShapeDtypeStruct((nb, 1), jnp.float32),
            grid=(nb, nd),
            in_specs=[
                pl.BlockSpec((TB, TD), lambda bi, dj: (bi, dj)),
                pl.BlockSpec((TB, TD), lambda bi, dj: (bi, dj)),
                pl.BlockSpec((TB, 1), lambda bi, dj: (bi, 0)),
            ],
            out_specs=pl.BlockSpec((1, 1), lambda bi, dj: (bi, 0),
                                   memory_space=pltpu.SMEM),
            scratch_shapes=[pltpu.VMEM((TB, 128), jnp.float32)],
            compiler_params=pltpu.CompilerParams(
                dimension_semantics=("parallel", "arbitrary"),
                vmem_limit_bytes=vmem_limit,
            ),
        )(x0, x1, y2)

    # Tiny epilogue reduction + constant-folded 0.5/B scale in the wrapper.
    return jnp.sum(partials) * (0.5 / B)


def _reference(x0, x1, y, margin=1.0):
    diff = x0.astype(jnp.float32) - x1.astype(jnp.float32)
    dist_sq = jnp.sum(diff * diff, axis=1)
    dist = jnp.sqrt(dist_sq + 1e-10)
    mdist = jnp.maximum(margin - dist, 0.0)
    loss = y.astype(jnp.float32) * dist_sq + (1.0 - y.astype(jnp.float32)) * (mdist ** 2)
    return jnp.sum(loss) / 2.0 / x0.shape[0]


if __name__ == "__main__":
    key = jax.random.PRNGKey(0)
    k0, k1, k2 = jax.random.split(key, 3)

    # Case 1: common single-feature-tile path, exact tile fit.
    B, D = 8, 32
    x0 = jax.random.normal(k0, (B, D), dtype=jnp.float32)
    x1 = jax.random.normal(k1, (B, D), dtype=jnp.float32)
    y = jax.random.bernoulli(k2, 0.5, (B,)).astype(jnp.float32)
    out = contrastive_loss(x0, x1, y, margin=1.0)
    jax.block_until_ready(out)
    ref = _reference(x0, x1, y, margin=1.0)
    assert jnp.allclose(out, ref, atol=1e-5, rtol=1e-5), (out, ref)

    # Case 2: ragged batch + ragged feature tail, multi-feature-tile path
    # forced via a tiny feature-tile budget (exercises in-kernel masking and
    # the lane-partial accumulator).
    B2, D2 = 13, 300
    x0b = jax.random.normal(k0, (B2, D2), dtype=jnp.float32)
    x1b = jax.random.normal(k1, (B2, D2), dtype=jnp.float32)
    yb = jax.random.bernoulli(k2, 0.5, (B2,)).astype(jnp.float32)
    out2 = contrastive_loss(x0b, x1b, yb, margin=1.0, max_tile_feature_bytes=512)
    jax.block_until_ready(out2)
    ref2 = _reference(x0b, x1b, yb, margin=1.0)
    assert jnp.allclose(out2, ref2, atol=1e-5, rtol=1e-5), (out2, ref2)

    print("KERNEL_OK")
</pallas_src>

<mosaic_0001>
module attributes {stable_mosaic.version = 11 : i64} {
  func.func @_contrastive_single_kernel(%arg0: i32, %arg1: memref<8x32xf32, #tpu.memory_space<vmem>>, %arg2: memref<8x32xf32, #tpu.memory_space<vmem>>, %arg3: memref<8x1xf32, #tpu.memory_space<vmem>>, %arg4: memref<1x1xf32, #tpu.memory_space<smem>>) attributes {dimension_semantics = [#tpu.dimension_semantics<parallel>], iteration_bounds = array<i64: 1>, scalar_prefetch = 0 : i64, scratch_operands = 0 : i64, tpu.core_type = #tpu.core_type<tc>, window_params = [{transform_indices = @transform_0, window_bounds = array<i64: 8, 32>}, {transform_indices = @transform_1, window_bounds = array<i64: 8, 32>}, {transform_indices = @transform_2, window_bounds = array<i64: 8, 1>}, {transform_indices = @transform_3, window_bounds = array<i64: 1, 1>}]} {
    %c0 = arith.constant 0 : index
    %c0_0 = arith.constant 0 : index
    %0 = vector.load %arg1[%c0, %c0_0] : memref<8x32xf32, #tpu.memory_space<vmem>>, vector<8x32xf32>
    %c0_1 = arith.constant 0 : index
    %c0_2 = arith.constant 0 : index
    %1 = vector.load %arg2[%c0_1, %c0_2] : memref<8x32xf32, #tpu.memory_space<vmem>>, vector<8x32xf32>
    %2 = arith.subf %0, %1 : vector<8x32xf32>
    %3 = arith.mulf %2, %2 : vector<8x32xf32>
    %cst = arith.constant dense<0.000000e+00> : vector<8xf32>
    %4 = vector.multi_reduction <add>, %3, %cst [1] : vector<8x32xf32> to vector<8xf32>
    %5 = vector.shape_cast %4 : vector<8xf32> to vector<8x1xf32>
    %c0_3 = arith.constant 0 : index
    %c0_4 = arith.constant 0 : index
    %6 = vector.load %arg3[%c0_3, %c0_4] : memref<8x1xf32, #tpu.memory_space<vmem>>, vector<8x1xf32>
    %cst_5 = arith.constant 1.000000e-10 : f32
    %7 = vector.broadcast %cst_5 : f32 to vector<8x1xf32>
    %8 = arith.addf %5, %7 : vector<8x1xf32>
    %9 = math.sqrt %8 : vector<8x1xf32>
    %cst_6 = arith.constant 1.000000e+00 : f32
    %10 = vector.broadcast %cst_6 : f32 to vector<8x1xf32>
    %11 = arith.subf %10, %9 : vector<8x1xf32>
    %cst_7 = arith.constant 0.000000e+00 : f32
    %12 = vector.broadcast %cst_7 : f32 to vector<8x1xf32>
    %13 = arith.maximumf %11, %12 : vector<8x1xf32>
    %14 = arith.mulf %6, %5 : vector<8x1xf32>
    %cst_8 = arith.constant 1.000000e+00 : f32
    %15 = vector.broadcast %cst_8 : f32 to vector<8x1xf32>
    %16 = arith.subf %15, %6 : vector<8x1xf32>
    %17 = arith.mulf %13, %13 : vector<8x1xf32>
    %18 = arith.mulf %16, %17 : vector<8x1xf32>
    %19 = arith.addf %14, %18 : vector<8x1xf32>
    %20 = vector.shape_cast %19 : vector<8x1xf32> to vector<1x8x1xf32>
    %cst_9 = arith.constant dense<0.000000e+00> : vector<1xf32>
    %21 = vector.multi_reduction <add>, %20, %cst_9 [1, 2] : vector<1x8x1xf32> to vector<1xf32>
    %22 = vector.shape_cast %21 : vector<1xf32> to vector<1x1x1xf32>
    %23 = vector.extract %22[0, 0, 0] : f32 from vector<1x1x1xf32>
    %c0_10 = arith.constant 0 : index
    %c0_11 = arith.constant 0 : index
    %24 = memref.load %arg4[%c0_10, %c0_11] : memref<1x1xf32, #tpu.memory_space<smem>>
    memref.store %23, %arg4[%c0_10, %c0_11] : memref<1x1xf32, #tpu.memory_space<smem>>
    return
  }
  func.func @transform_0(%arg0: i32) -> (i32, i32) {
    %c0_i32 = arith.constant 0 : i32
    %c0_i32_0 = arith.constant 0 : i32
    return %arg0, %c0_i32 : i32, i32
  }
  func.func @transform_1(%arg0: i32) -> (i32, i32) {
    %c0_i32 = arith.constant 0 : i32
    %c0_i32_0 = arith.constant 0 : i32
    return %arg0, %c0_i32 : i32, i32
  }
  func.func @transform_2(%arg0: i32) -> (i32, i32) {
    %c0_i32 = arith.constant 0 : i32
    %c0_i32_0 = arith.constant 0 : i32
    return %arg0, %c0_i32 : i32, i32
  }
  func.func @transform_3(%arg0: i32) -> (i32, i32) {
    %c0_i32 = arith.constant 0 : i32
    %c0_i32_0 = arith.constant 0 : i32
    return %arg0, %c0_i32 : i32, i32
  }
}

</mosaic_0001>

<llo_original>
// kernel: tpu_custom_call.1
$region0: #{tpu_custom_call.1}
  #allocation0 [shape = 'u32[]', space=smem, size = 0x4, offset = 0x4, fixed_abs, tag = 'smem constant byte address 0x4 - core index']
  #allocation1 [shape = 'u32[144,128]{1,0:T(1,128)}', space=vmem, size = 0x12000, scoped, tag = 'internal scratch']
  %s0 = inlined_call_operand.vmem [shape: f32[8,32], index: 0, kind: input, shape index: {}]
  %s1 = inlined_call_operand.hbm [shape: f32[8,32], index: 1, kind: input, shape index: {}]
  %s2 = inlined_call_operand.vmem [shape: f32[8,1], index: 2, kind: input, shape index: {}]
  %s3 = inlined_call_operand.hbm [shape: f32[1,1], index: 3, kind: output, shape index: {}]
  %s4 = sld [smem:[#allocation0]]
  $region26: #{tpu_custom_call.1} parent=0
    _
  %s6 = ssub.s32 1, %s4
  %s7 = scalar_select 0, %s6, %s4
  $region1: #{tpu_custom_call.1} parent=0
    #allocation2 [shape = 'u8[4096]{0}', space=vmem, size = 0x1000, scoped, tag = 'input window, operand 1, single buffered']
    #allocation3 [shape = 's32[1]{0}', space=sflag, size = 0x4, scoped, tag = 'scoped memory for tpu_custom_call.1']
    #allocation4 [shape = 's32[1]{0}', space=sflag, size = 0x4, scoped, tag = 'scoped memory for tpu_custom_call.1']
    #allocation5 [shape = 'u8[512]{0}', space=smem, size = 0x200, scoped, tag = 'output window, operand 0, single buffered']
    %8 = vsyncpa [#allocation3], 0
    %9 = vsyncpa [#allocation4], 0
    // Predicated region
    $region2: #{tpu_custom_call.1} parent=1 // pred_check
      _
    $region3: #{tpu_custom_call.1} parent=1 // pred_check_branch
      %11 = sbr.rel (0) target = $region5
    $region4: #{tpu_custom_call.1} parent=1 // pred_region
      _
    $region5: #{tpu_custom_call.1} parent=1 // pred_fallthru
      _
    // Predicated region
    $region6: #{tpu_custom_call.1} parent=1 // pred_check
      _
    $region7: #{tpu_custom_call.1} parent=1 // pred_check_branch
      %13 = sbr.rel (0) target = $region9
    $region8: #{tpu_custom_call.1} parent=1 // pred_region
      %s15 = ssub.s32 128, 128
      %16 = vsyncadd [#allocation3], %s15
      %s18 = sshll.u32 [#allocation2], 4
      %s19 = int_to_ptr.vmem [resolvable:$true] %s18
      %21 = dma.hbm_to_vmem [thread:$0]  %s1, 128, %s19, [#allocation3]
    $region9: #{tpu_custom_call.1} parent=1 // pred_fallthru
      _
    // Predicated region
    $region10: #{tpu_custom_call.1} parent=1 // pred_check
      _
    $region11: #{tpu_custom_call.1} parent=1 // pred_check_branch
      %23 = sbr.rel (0) target = $region13
    $region12: #{tpu_custom_call.1} parent=1 // pred_region
      _
    $region13: #{tpu_custom_call.1} parent=1 // pred_fallthru
      _
    // Predicated region
    $region14: #{tpu_custom_call.1} parent=1 // pred_check
      _
    $region15: #{tpu_custom_call.1} parent=1 // pred_check_branch
      %25 = sbr.rel (0) target = $region17
    $region16: #{tpu_custom_call.1} parent=1 // pred_region
      %26 = dma.done [#allocation3], 128
    $region17: #{tpu_custom_call.1} parent=1 // pred_fallthru
      _
    %v27 = vld [vmem:[%s0] sm:$0xff]
    %v28 = vld [vmem:[#allocation2] sm:$0xff]
    %v29 = vsub.f32 %v27, %v28
    %v30 = vmul.f32 %v29, %v29
    %vm31 = vcmask 261120
    %v32 = vsel %vm31, %v30, 0.0
    %33 = vadd.xlane.f32.xlu0 %v32
    %v34 = vpop.xlane.xlu0 %33
    %v35 = vld [vmem:[%s2] sm:$0xff]
    %v36 = vadd.f32 %v34, 1e-10
    %v37 = vrsqrt.pop %v36
    %v38 = vmul.f32 %v36, %v37
    %vm39 = vcmp.eq.f32.partialorder %v36, inf
    %v40 = vsel %vm39, %v36, %v38
    %vm41 = vcmp.eq.f32.partialorder %v36, 0.0
    %v42 = vand.u32 %v36, 2147483648
    %v43 = vsel %vm41, %v42, %v40
    %v44 = vsub.f32 1.0, %v43
    %v45 = vmax.f32 %v44, 0.0
    %v46 = vmul.f32 %v35, %v34
    %v47 = vsub.f32 1.0, %v35
    %v48 = vmul.f32 %v45, %v45
    %v49 = vmul.f32 %v47, %v48
    %v50 = vadd.f32 %v46, %v49
    %vm51 = vcmask 7168
    %v52 = vsel %vm51, %v50, 0.0
    %53 = vadd.xlane.f32.xlu0 %v52
    %v54 = vpop.xlane.xlu0 %53
    %v55 = vrot.slane %v54, 4
    %v56 = vadd.f32 %v54, %v55
    %v57 = vrot.slane %v56, 2
    %v58 = vadd.f32 %v56, %v57
    %v59 = vrot.slane %v58, 1
    %v60 = vadd.f32 %v58, %v59
    %s61 = vtos %v60
    %s62 = scalar_lea.smem [#allocation5], 0
    %63 = sst [smem:[%s62]] %s61
    // Predicated region
    $region18: #{tpu_custom_call.1} parent=1 // pred_check
      _
    $region19: #{tpu_custom_call.1} parent=1 // pred_check_branch
      %65 = sbr.rel (0) target = $region21
    $region20: #{tpu_custom_call.1} parent=1 // pred_region
      %s67 = ssub.s32 16, 16
      %68 = vsyncadd [#allocation4], %s67
      %71 = dma.smem_to_hbm [#allocation5], 16, %s3, [#allocation4]
    $region21: #{tpu_custom_call.1} parent=1 // pred_fallthru
      _
    // Predicated region
    $region22: #{tpu_custom_call.1} parent=1 // pred_check
      _
    $region23: #{tpu_custom_call.1} parent=1 // pred_check_branch
      %73 = sbr.rel (0) target = $region25
    $region24: #{tpu_custom_call.1} parent=1 // pred_region
      %74 = dma.done [#allocation4], 16
    $region25: #{tpu_custom_call.1} parent=1 // pred_fallthru
      _
    %75 = sfence
    %76 = vsyncpa [#allocation3], 1
    %77 = vsyncpa [#allocation4], 1

</llo_original>
